<compile_context>
chip_gen: v7x
topology: tpu7x:2x2x1
jax: 0.10.0
libtpu: 0.0.40
codegen_flags: <defaults>
</compile_context>

<pallas_src>
import jax
import jax.numpy as jnp
from jax.experimental import pallas as pl
from jax.experimental.pallas import tpu as pltpu

EPS = 1e-5
_VMEM = pl.BlockSpec(memory_space=pltpu.MemorySpace.VMEM)


# --------------------------------------------------------------------------- #
# Parameter packing (ONE-TIME; do not call per forward)
# --------------------------------------------------------------------------- #
def prepare_params(params, matmul_dtype=jnp.bfloat16):
    """Cast weights to the MXU operand dtype once; BN affine stays f32 [1, H]."""
    hid = params["w1t"].shape[1]
    return {
        "w1": jnp.asarray(params["w1t"], matmul_dtype),          # [C_in, H]
        "w2": jnp.asarray(params["w2t"], matmul_dtype),          # [H, H]
        "g1": jnp.asarray(params["g1"], jnp.float32).reshape(1, hid),
        "be1": jnp.asarray(params["be1"], jnp.float32).reshape(1, hid),
        "g2": jnp.asarray(params["g2"], jnp.float32).reshape(1, hid),
        "be2": jnp.asarray(params["be2"], jnp.float32).reshape(1, hid),
    }


# --------------------------------------------------------------------------- #
# Path A: fused single-block kernel (small / mid N, launch-overhead bound)
# --------------------------------------------------------------------------- #
def _fused_kernel(x_ref, w1_ref, g1_ref, be1_ref, w2_ref, g2_ref, be2_ref, o_ref):
    n = x_ref.shape[0]
    inv_n = 1.0 / n  # static python float

    # Linear1 (bias dropped: exactly cancelled by the training-mode BN below).
    h = jnp.dot(x_ref[...].astype(w1_ref.dtype), w1_ref[...],
                preferred_element_type=jnp.float32)

    # BN1 (single-pass batch stats, fused scale/shift) + ReLU, all f32 on the VPU.
    mean1 = jnp.sum(h, axis=0, keepdims=True) * inv_n
    msq1 = jnp.sum(h * h, axis=0, keepdims=True) * inv_n
    var1 = jnp.maximum(msq1 - mean1 * mean1, 0.0)
    scale1 = g1_ref[...] * jax.lax.rsqrt(var1 + EPS)
    shift1 = be1_ref[...] - mean1 * scale1
    h = jnp.maximum(h * scale1 + shift1, 0.0)

    # Linear2 (plain last layer; bias dropped, cancelled by BN below).
    h = jnp.dot(h.astype(w2_ref.dtype), w2_ref[...],
                preferred_element_type=jnp.float32)

    # BN_last.
    mean2 = jnp.sum(h, axis=0, keepdims=True) * inv_n
    msq2 = jnp.sum(h * h, axis=0, keepdims=True) * inv_n
    var2 = jnp.maximum(msq2 - mean2 * mean2, 0.0)
    scale2 = g2_ref[...] * jax.lax.rsqrt(var2 + EPS)
    shift2 = be2_ref[...] - mean2 * scale2

    # dropout(p=0.0) identity; final_activation=None identity.
    o_ref[...] = (h * scale2 + shift2).astype(o_ref.dtype)


def custom_mlp_fused(x, p):
    n, c_in = x.shape
    hid = p["w1"].shape[1]
    flops = 2 * n * (c_in * hid + hid * hid)
    bytes_accessed = int(x.size * x.dtype.itemsize
                         + sum(v.size * v.dtype.itemsize for v in p.values())
                         + n * hid * 4)
    return pl.pallas_call(
        _fused_kernel,
        out_shape=jax.ShapeDtypeStruct((n, hid), jnp.float32),
        in_specs=[_VMEM] * 7,
        out_specs=_VMEM,
        compiler_params=pltpu.CompilerParams(vmem_limit_bytes=32 * 1024 * 1024),
        cost_estimate=pl.CostEstimate(flops=flops, transcendentals=0,
                                      bytes_accessed=bytes_accessed),
    )(x, p["w1"], p["g1"], p["be1"], p["w2"], p["g2"], p["be2"])


# --------------------------------------------------------------------------- #
# Path B: row-tiled, two-phase-BN pipeline (graph-scale N)
# --------------------------------------------------------------------------- #
def _make_lin1_stats_kernel(n_rows, tile):
    need_mask = (n_rows % tile) != 0

    def kernel(x_ref, w1_ref, h1_ref, s_ref, ss_ref):
        h = jnp.dot(x_ref[...].astype(w1_ref.dtype), w1_ref[...],
                    preferred_element_type=jnp.float32)
        h1_ref[...] = h
        hm = h
        if need_mask:  # exclude out-of-range rows of the last tile from the stats
            row0 = pl.program_id(0) * tile
            rid = jax.lax.broadcasted_iota(jnp.int32, (tile, 1), 0) + row0
            hm = jnp.where(rid < n_rows, h, 0.0)
        s_ref[...] = jnp.sum(hm, axis=0, keepdims=True).reshape(1, 1, -1)
        ss_ref[...] = jnp.sum(hm * hm, axis=0, keepdims=True).reshape(1, 1, -1)

    return kernel


def _make_bn_relu_lin2_stats_kernel(n_rows, tile):
    need_mask = (n_rows % tile) != 0

    def kernel(h1_ref, w2_ref, sc1_ref, sh1_ref, h2_ref, s_ref, ss_ref):
        r = jnp.maximum(h1_ref[...] * sc1_ref[...] + sh1_ref[...], 0.0)
        h = jnp.dot(r.astype(w2_ref.dtype), w2_ref[...],
                    preferred_element_type=jnp.float32)
        h2_ref[...] = h
        hm = h
        if need_mask:
            row0 = pl.program_id(0) * tile
            rid = jax.lax.broadcasted_iota(jnp.int32, (tile, 1), 0) + row0
            hm = jnp.where(rid < n_rows, h, 0.0)
        s_ref[...] = jnp.sum(hm, axis=0, keepdims=True).reshape(1, 1, -1)
        ss_ref[...] = jnp.sum(hm * hm, axis=0, keepdims=True).reshape(1, 1, -1)

    return kernel


def _bn2_kernel(h2_ref, sc2_ref, sh2_ref, o_ref):
    o_ref[...] = (h2_ref[...] * sc2_ref[...] + sh2_ref[...]).astype(o_ref.dtype)


def _finalize_bn(s_part, ss_part, gamma, beta, n_rows):
    """Combine per-tile partial sums into global fused BN scale/shift ([1, H])."""
    s = jnp.sum(s_part[:, 0, :], axis=0)
    ss = jnp.sum(ss_part[:, 0, :], axis=0)
    mean = s / n_rows                       # true batch size, NOT the tile size
    var = jnp.maximum(ss / n_rows - mean * mean, 0.0)
    scale = gamma * jax.lax.rsqrt(var + EPS)
    shift = beta - mean * scale
    return scale, shift


def custom_mlp_tiled(x, p, tile=4096):
    n, c_in = x.shape
    hid = p["w1"].shape[1]
    tile = min(tile, n)
    grid = (pl.cdiv(n, tile),)
    g = grid[0]

    cparams = pltpu.CompilerParams(dimension_semantics=("parallel",),
                                   vmem_limit_bytes=32 * 1024 * 1024)

    x_spec = pl.BlockSpec((tile, c_in), lambda i: (i, 0))
    h_spec = pl.BlockSpec((tile, hid), lambda i: (i, 0))
    w1_spec = pl.BlockSpec((c_in, hid), lambda i: (0, 0))
    w2_spec = pl.BlockSpec((hid, hid), lambda i: (0, 0))
    vec_spec = pl.BlockSpec((1, hid), lambda i: (0, 0))
    st_spec = pl.BlockSpec((1, 1, hid), lambda i: (i, 0, 0))
    st_shape = jax.ShapeDtypeStruct((g, 1, hid), jnp.float32)

    # ---- phase 1: Linear1 per row tile + BN1 partial sum/sumsq ----
    h1, s1, ss1 = pl.pallas_call(
        _make_lin1_stats_kernel(n, tile),
        grid=grid,
        out_shape=(jax.ShapeDtypeStruct((n, hid), jnp.float32), st_shape, st_shape),
        in_specs=[x_spec, w1_spec],
        out_specs=(h_spec, st_spec, st_spec),
        compiler_params=cparams,
    )(x, p["w1"])
    sc1, sh1 = _finalize_bn(s1, ss1, p["g1"], p["be1"], n)

    # ---- phase 2: BN1 + ReLU + Linear2 per row tile + BN2 partial sum/sumsq ----
    h2, s2, ss2 = pl.pallas_call(
        _make_bn_relu_lin2_stats_kernel(n, tile),
        grid=grid,
        out_shape=(jax.ShapeDtypeStruct((n, hid), jnp.float32), st_shape, st_shape),
        in_specs=[h_spec, w2_spec, vec_spec, vec_spec],
        out_specs=(h_spec, st_spec, st_spec),
        compiler_params=cparams,
    )(h1, p["w2"], sc1, sh1)
    sc2, sh2 = _finalize_bn(s2, ss2, p["g2"], p["be2"], n)

    # ---- phase 3: BN_last normalize ----
    out = pl.pallas_call(
        _bn2_kernel,
        grid=grid,
        out_shape=jax.ShapeDtypeStruct((n, hid), jnp.float32),
        in_specs=[h_spec, vec_spec, vec_spec],
        out_specs=h_spec,
        compiler_params=cparams,
    )(h2, sc2, sh2)
    return out


def custom_mlp(x, prepared, *, row_tile=4096, fused_max_rows=16384):
    """Dispatch: fused single-block for small/mid N, row-tiled pipeline otherwise."""
    if x.shape[0] <= fused_max_rows:
        return custom_mlp_fused(x, prepared)
    return custom_mlp_tiled(x, prepared, tile=row_tile)


# --------------------------------------------------------------------------- #
# Parameters & spec-faithful reference (biases included, two-pass BN stats)
# --------------------------------------------------------------------------- #
def init_params(key, in_channels, hidden_channels):
    k1, k2, k3, k4, k5, k6 = jax.random.split(key, 6)
    # PyTorch Linear weights are [out, in]; store pre-transposed [in, out].
    w1 = jax.random.normal(k1, (hidden_channels, in_channels), jnp.float32) * 0.1
    b1 = jax.random.normal(k2, (hidden_channels,), jnp.float32) * 0.1
    w2 = jax.random.normal(k3, (hidden_channels, hidden_channels), jnp.float32) * 0.1
    b2 = jax.random.normal(k4, (hidden_channels,), jnp.float32) * 0.1
    g1 = 1.0 + 0.05 * jax.random.normal(k5, (hidden_channels,), jnp.float32)
    be1 = 0.05 * jax.random.normal(k6, (hidden_channels,), jnp.float32)
    g2 = jnp.linspace(0.9, 1.1, hidden_channels, dtype=jnp.float32)
    be2 = jnp.linspace(-0.1, 0.1, hidden_channels, dtype=jnp.float32)
    # b1/b2 kept only for the reference (kernel drops them; training BN cancels them).
    return {
        "w1t": w1.T, "b1": b1.reshape(1, -1),
        "g1": g1.reshape(1, -1), "be1": be1.reshape(1, -1),
        "w2t": w2.T, "b2": b2.reshape(1, -1),
        "g2": g2.reshape(1, -1), "be2": be2.reshape(1, -1),
    }


def reference(x, p, matmul_dtype=jnp.float32):
    h = jnp.dot(x.astype(matmul_dtype), p["w1t"].astype(matmul_dtype),
                preferred_element_type=jnp.float32) + p["b1"]
    m = h.mean(0, keepdims=True)
    v = ((h - m) ** 2).mean(0, keepdims=True)
    h = (h - m) / jnp.sqrt(v + EPS) * p["g1"] + p["be1"]
    h = jnp.maximum(h, 0.0)
    h = jnp.dot(h.astype(matmul_dtype), p["w2t"].astype(matmul_dtype),
                preferred_element_type=jnp.float32) + p["b2"]
    m = h.mean(0, keepdims=True)
    v = ((h - m) ** 2).mean(0, keepdims=True)
    h = (h - m) / jnp.sqrt(v + EPS) * p["g2"] + p["be2"]
    return h


if __name__ == "__main__":
    IN_C, HID = 16, 32
    key = jax.random.PRNGKey(0)
    kx1, kx2, kp = jax.random.split(key, 3)
    params = init_params(kp, IN_C, HID)

    prep_f32 = prepare_params(params, jnp.float32)    # strict-parity path
    prep_bf16 = prepare_params(params, jnp.bfloat16)  # default performance path

    # ---- shipped size (N=64): fused single-block path ----
    N = 64
    x = jax.random.normal(kx1, (N, IN_C), jnp.float32)

    out_f32 = custom_mlp(x, prep_f32)
    jax.block_until_ready(out_f32)
    ref_f32 = reference(x, params, jnp.float32)
    assert out_f32.shape == (N, HID)
    assert jnp.allclose(out_f32, ref_f32, atol=2e-4, rtol=2e-4)

    out_bf16 = custom_mlp(x, prep_bf16)
    jax.block_until_ready(out_bf16)
    ref_bf16 = reference(x, params, jnp.bfloat16)
    assert out_bf16.shape == (N, HID)
    assert jnp.allclose(out_bf16, ref_bf16, atol=2e-2, rtol=2e-2)

    # ---- row-tiled two-phase-BN path (graph-scale structure, small demo size) ----
    N2, TILE = 1024, 256
    x2 = jax.random.normal(kx2, (N2, IN_C), jnp.float32)

    out_t32 = custom_mlp_tiled(x2, prep_f32, tile=TILE)
    jax.block_until_ready(out_t32)
    ref_t32 = reference(x2, params, jnp.float32)
    assert out_t32.shape == (N2, HID)
    assert jnp.allclose(out_t32, ref_t32, atol=2e-4, rtol=2e-4)

    out_tb = custom_mlp_tiled(x2, prep_bf16, tile=TILE)
    jax.block_until_ready(out_tb)
    ref_tb = reference(x2, params, jnp.bfloat16)
    assert jnp.allclose(out_tb, ref_tb, atol=2e-2, rtol=2e-2)

    print("KERNEL_OK")
</pallas_src>

<mosaic_0001>
module attributes {stable_mosaic.version = 11 : i64} {
  func.func @_fused_kernel(%arg0: memref<64x16xf32, #tpu.memory_space<vmem>>, %arg1: memref<16x32xf32, #tpu.memory_space<vmem>>, %arg2: memref<1x32xf32, #tpu.memory_space<vmem>>, %arg3: memref<1x32xf32, #tpu.memory_space<vmem>>, %arg4: memref<32x32xf32, #tpu.memory_space<vmem>>, %arg5: memref<1x32xf32, #tpu.memory_space<vmem>>, %arg6: memref<1x32xf32, #tpu.memory_space<vmem>>, %arg7: memref<64x32xf32, #tpu.memory_space<vmem>>) attributes {dimension_semantics = [], scalar_prefetch = 0 : i64, scratch_operands = 0 : i64, tpu.core_type = #tpu.core_type<tc>} {
    %c0 = arith.constant 0 : index
    %c0_0 = arith.constant 0 : index
    %0 = vector.load %arg0[%c0, %c0_0] : memref<64x16xf32, #tpu.memory_space<vmem>>, vector<64x16xf32>
    %c0_1 = arith.constant 0 : index
    %c0_2 = arith.constant 0 : index
    %1 = vector.load %arg1[%c0_1, %c0_2] : memref<16x32xf32, #tpu.memory_space<vmem>>, vector<16x32xf32>
    %cst = arith.constant dense<0.000000e+00> : vector<64x32xf32>
    %2 = tpu.matmul %0, %1, %cst {dimension_numbers = #tpu.dot_dimension_numbers<[1], [0], [0], [1], [0, 0, 1, 1], [], []>} : vector<64x16xf32>, vector<16x32xf32>, vector<64x32xf32> -> vector<64x32xf32>
    %cst_3 = arith.constant dense<0.000000e+00> : vector<32xf32>
    %3 = vector.multi_reduction <add>, %2, %cst_3 [0] : vector<64x32xf32> to vector<32xf32>
    %4 = vector.shape_cast %3 : vector<32xf32> to vector<1x32xf32>
    %cst_4 = arith.constant 1.562500e-02 : f32
    %5 = vector.broadcast %cst_4 : f32 to vector<1x32xf32>
    %6 = arith.mulf %4, %5 : vector<1x32xf32>
    %7 = arith.mulf %2, %2 : vector<64x32xf32>
    %cst_5 = arith.constant dense<0.000000e+00> : vector<32xf32>
    %8 = vector.multi_reduction <add>, %7, %cst_5 [0] : vector<64x32xf32> to vector<32xf32>
    %9 = vector.shape_cast %8 : vector<32xf32> to vector<1x32xf32>
    %cst_6 = arith.constant 1.562500e-02 : f32
    %10 = vector.broadcast %cst_6 : f32 to vector<1x32xf32>
    %11 = arith.mulf %9, %10 : vector<1x32xf32>
    %12 = arith.mulf %6, %6 : vector<1x32xf32>
    %13 = arith.subf %11, %12 : vector<1x32xf32>
    %cst_7 = arith.constant 0.000000e+00 : f32
    %14 = vector.broadcast %cst_7 : f32 to vector<1x32xf32>
    %15 = arith.maximumf %13, %14 : vector<1x32xf32>
    %c0_8 = arith.constant 0 : index
    %c0_9 = arith.constant 0 : index
    %16 = vector.load %arg2[%c0_8, %c0_9] : memref<1x32xf32, #tpu.memory_space<vmem>>, vector<1x32xf32>
    %cst_10 = arith.constant 9.99999974E-6 : f32
    %17 = vector.broadcast %cst_10 : f32 to vector<1x32xf32>
    %18 = arith.addf %15, %17 : vector<1x32xf32>
    %19 = math.rsqrt %18 : vector<1x32xf32>
    %20 = arith.mulf %16, %19 : vector<1x32xf32>
    %c0_11 = arith.constant 0 : index
    %c0_12 = arith.constant 0 : index
    %21 = vector.load %arg3[%c0_11, %c0_12] : memref<1x32xf32, #tpu.memory_space<vmem>>, vector<1x32xf32>
    %22 = arith.mulf %6, %20 : vector<1x32xf32>
    %23 = arith.subf %21, %22 : vector<1x32xf32>
    %24 = vector.broadcast %20 : vector<1x32xf32> to vector<64x32xf32>
    %25 = arith.mulf %2, %24 : vector<64x32xf32>
    %26 = vector.broadcast %23 : vector<1x32xf32> to vector<64x32xf32>
    %27 = arith.addf %25, %26 : vector<64x32xf32>
    %cst_13 = arith.constant 0.000000e+00 : f32
    %28 = vector.broadcast %cst_13 : f32 to vector<64x32xf32>
    %29 = arith.maximumf %27, %28 : vector<64x32xf32>
    %c0_14 = arith.constant 0 : index
    %c0_15 = arith.constant 0 : index
    %30 = vector.load %arg4[%c0_14, %c0_15] : memref<32x32xf32, #tpu.memory_space<vmem>>, vector<32x32xf32>
    %cst_16 = arith.constant dense<0.000000e+00> : vector<64x32xf32>
    %31 = tpu.matmul %29, %30, %cst_16 {dimension_numbers = #tpu.dot_dimension_numbers<[1], [0], [0], [1], [0, 0, 1, 1], [], []>} : vector<64x32xf32>, vector<32x32xf32>, vector<64x32xf32> -> vector<64x32xf32>
    %cst_17 = arith.constant dense<0.000000e+00> : vector<32xf32>
    %32 = vector.multi_reduction <add>, %31, %cst_17 [0] : vector<64x32xf32> to vector<32xf32>
    %33 = vector.shape_cast %32 : vector<32xf32> to vector<1x32xf32>
    %cst_18 = arith.constant 1.562500e-02 : f32
    %34 = vector.broadcast %cst_18 : f32 to vector<1x32xf32>
    %35 = arith.mulf %33, %34 : vector<1x32xf32>
    %36 = arith.mulf %31, %31 : vector<64x32xf32>
    %cst_19 = arith.constant dense<0.000000e+00> : vector<32xf32>
    %37 = vector.multi_reduction <add>, %36, %cst_19 [0] : vector<64x32xf32> to vector<32xf32>
    %38 = vector.shape_cast %37 : vector<32xf32> to vector<1x32xf32>
    %cst_20 = arith.constant 1.562500e-02 : f32
    %39 = vector.broadcast %cst_20 : f32 to vector<1x32xf32>
    %40 = arith.mulf %38, %39 : vector<1x32xf32>
    %41 = arith.mulf %35, %35 : vector<1x32xf32>
    %42 = arith.subf %40, %41 : vector<1x32xf32>
    %cst_21 = arith.constant 0.000000e+00 : f32
    %43 = vector.broadcast %cst_21 : f32 to vector<1x32xf32>
    %44 = arith.maximumf %42, %43 : vector<1x32xf32>
    %c0_22 = arith.constant 0 : index
    %c0_23 = arith.constant 0 : index
    %45 = vector.load %arg5[%c0_22, %c0_23] : memref<1x32xf32, #tpu.memory_space<vmem>>, vector<1x32xf32>
    %cst_24 = arith.constant 9.99999974E-6 : f32
    %46 = vector.broadcast %cst_24 : f32 to vector<1x32xf32>
    %47 = arith.addf %44, %46 : vector<1x32xf32>
    %48 = math.rsqrt %47 : vector<1x32xf32>
    %49 = arith.mulf %45, %48 : vector<1x32xf32>
    %c0_25 = arith.constant 0 : index
    %c0_26 = arith.constant 0 : index
    %50 = vector.load %arg6[%c0_25, %c0_26] : memref<1x32xf32, #tpu.memory_space<vmem>>, vector<1x32xf32>
    %51 = arith.mulf %35, %49 : vector<1x32xf32>
    %52 = arith.subf %50, %51 : vector<1x32xf32>
    %53 = vector.broadcast %49 : vector<1x32xf32> to vector<64x32xf32>
    %54 = arith.mulf %31, %53 : vector<64x32xf32>
    %55 = vector.broadcast %52 : vector<1x32xf32> to vector<64x32xf32>
    %56 = arith.addf %54, %55 : vector<64x32xf32>
    %c0_27 = arith.constant 0 : index
    %c0_28 = arith.constant 0 : index
    %57 = vector.load %arg7[%c0_27, %c0_28] : memref<64x32xf32, #tpu.memory_space<vmem>>, vector<64x32xf32>
    tpu.vector_store %arg7[%c0_27, %c0_28], %56 {strides = array<i32>} : memref<64x32xf32, #tpu.memory_space<vmem>>, vector<64x32xf32>,
    return
  }
}

</mosaic_0001>

<llo_original>
// kernel: tpu_custom_call.1
$region0: #{tpu_custom_call.1}
  #allocation0 [shape = 'u32[]', space=smem, size = 0x4, offset = 0x4, fixed_abs, tag = 'smem constant byte address 0x4 - core index']
  #allocation1 [shape = 'u32[144,128]{1,0:T(1,128)}', space=vmem, size = 0x12000, scoped, tag = 'internal scratch']
  %s0 = inlined_call_operand.vmem [shape: f32[64,16], index: 0, kind: input, shape index: {}]
  %s1 = inlined_call_operand.vmem [shape: f32[16,32], index: 1, kind: input, shape index: {}]
  %s2 = inlined_call_operand.vmem [shape: f32[1,32], index: 2, kind: input, shape index: {}]
  %s3 = inlined_call_operand.vmem [shape: f32[1,32], index: 3, kind: input, shape index: {}]
  %s4 = inlined_call_operand.vmem [shape: f32[32,32], index: 4, kind: input, shape index: {}]
  %s5 = inlined_call_operand.vmem [shape: f32[1,32], index: 5, kind: input, shape index: {}]
  %s6 = inlined_call_operand.vmem [shape: f32[1,32], index: 6, kind: input, shape index: {}]
  %s7 = inlined_call_operand.vmem [shape: f32[64,32], index: 7, kind: output, shape index: {}]
  %s8 = sld [smem:[#allocation0]]
  $region38: #{tpu_custom_call.1} parent=0
    _
  %s10 = ssub.s32 1, %s8
  %s11 = scalar_select 0, %s10, %s8
  // Predicated region
  $region2: #{tpu_custom_call.1} parent=0 // pred_check
    _
  $region3: #{tpu_custom_call.1} parent=0 // pred_check_branch
    %13 = sbr.rel (0) target = $region5
  $region4: #{tpu_custom_call.1} parent=0 // pred_region
    _
  $region5: #{tpu_custom_call.1} parent=0 // pred_fallthru
    _
  // Predicated region
  $region6: #{tpu_custom_call.1} parent=0 // pred_check
    _
  $region7: #{tpu_custom_call.1} parent=0 // pred_check_branch
    %15 = sbr.rel (0) target = $region9
  $region8: #{tpu_custom_call.1} parent=0 // pred_region
    _
  $region9: #{tpu_custom_call.1} parent=0 // pred_fallthru
    _
  // Predicated region
  $region10: #{tpu_custom_call.1} parent=0 // pred_check
    _
  $region11: #{tpu_custom_call.1} parent=0 // pred_check_branch
    %17 = sbr.rel (0) target = $region13
  $region12: #{tpu_custom_call.1} parent=0 // pred_region
    _
  $region13: #{tpu_custom_call.1} parent=0 // pred_fallthru
    _
  // Predicated region
  $region14: #{tpu_custom_call.1} parent=0 // pred_check
    _
  $region15: #{tpu_custom_call.1} parent=0 // pred_check_branch
    %19 = sbr.rel (0) target = $region17
  $region16: #{tpu_custom_call.1} parent=0 // pred_region
    _
  $region17: #{tpu_custom_call.1} parent=0 // pred_fallthru
    _
  // Predicated region
  $region18: #{tpu_custom_call.1} parent=0 // pred_check
    _
  $region19: #{tpu_custom_call.1} parent=0 // pred_check_branch
    %21 = sbr.rel (0) target = $region21
  $region20: #{tpu_custom_call.1} parent=0 // pred_region
    _
  $region21: #{tpu_custom_call.1} parent=0 // pred_fallthru
    _
  // Predicated region
  $region22: #{tpu_custom_call.1} parent=0 // pred_check
    _
  $region23: #{tpu_custom_call.1} parent=0 // pred_check_branch
    %23 = sbr.rel (0) target = $region25
  $region24: #{tpu_custom_call.1} parent=0 // pred_region
    _
  $region25: #{tpu_custom_call.1} parent=0 // pred_fallthru
    _
  // Predicated region
  $region26: #{tpu_custom_call.1} parent=0 // pred_check
    _
  $region27: #{tpu_custom_call.1} parent=0 // pred_check_branch
    %25 = sbr.rel (0) target = $region29
  $region28: #{tpu_custom_call.1} parent=0 // pred_region
    _
  $region29: #{tpu_custom_call.1} parent=0 // pred_fallthru
    _
  %v26 = vld [vmem:[%s0] sm:$0xff]
  %v27 = vld [vmem:[%s0 + $0x8] sm:$0xff]
  %v28 = vld [vmem:[%s0 + $0x10] sm:$0xff]
  %v29 = vld [vmem:[%s0 + $0x18] sm:$0xff]
  %v30 = vld [vmem:[%s0 + $0x20] sm:$0xff]
  %v31 = vld [vmem:[%s0 + $0x28] sm:$0xff]
  %v32 = vld [vmem:[%s0 + $0x30] sm:$0xff]
  %v33 = vld [vmem:[%s0 + $0x38] sm:$0xff]
  %v34 = vld [vmem:[%s1] sm:$0xff]
  %v35 = vld [vmem:[%s1 + $0x8] sm:$0xff]
  %vm36 = vcmask 130048
  %v38 = vsel %vm36, %v26, 0
  %v41 = vsel %vm36, %v27, 0
  %v44 = vsel %vm36, %v28, 0
  %v47 = vsel %vm36, %v29, 0
  %v50 = vsel %vm36, %v30, 0
  %v53 = vsel %vm36, %v31, 0
  %v56 = vsel %vm36, %v32, 0
  %v59 = vsel %vm36, %v33, 0
  %61 = vmatprep.subr.mxu0 0.0
  %62 = vmatpush1.msra.mxu0 %v34
  %63 = vmatprep.subr.mxu0 0.0
  %64 = vmatpush1.msra.mxu0 %v35
  %65 = vmatprep.subr.mxu0 0.0
  %66 = vmatpush1.msra.mxu0 0.0
  %67 = vmatprep.subr.mxu0 0.0
  %68 = vmatpush1.msra.mxu0 0.0
  %69 = vmatprep.subr.mxu0 0.0
  %70 = vmatpush1.msra.mxu0 0.0
  %71 = vmatprep.subr.mxu0 0.0
  %72 = vmatpush1.msra.mxu0 0.0
  %73 = vmatprep.subr.mxu0 0.0
  %74 = vmatpush1.msra.mxu0 0.0
  %75 = vmatprep.subr.mxu0 0.0
  %76 = vmatpush1.msra.mxu0 0.0
  %77 = vmatprep.subr.mxu0 0.0
  %78 = vmatpush1.msra.mxu0 0.0
  %79 = vmatprep.subr.mxu0 0.0
  %80 = vmatpush1.msra.mxu0 0.0
  %81 = vmatprep.subr.mxu0 0.0
  %82 = vmatpush1.msra.mxu0 0.0
  %83 = vmatprep.subr.mxu0 0.0
  %84 = vmatpush1.msra.mxu0 0.0
  %85 = vmatprep.subr.mxu0 0.0
  %86 = vmatpush1.msra.mxu0 0.0
  %87 = vmatprep.subr.mxu0 0.0
  %88 = vmatpush1.msra.mxu0 0.0
  %89 = vmatprep.subr.mxu0 0.0
  %90 = vmatpush1.msra.mxu0 0.0
  %91 = vmatprep.subr.mxu0 0.0
  %92 = vmatpush1.msra.mxu0 0.0
  %93 = vmatprep.subr.mxu0 0.0
  %94 = vmatpush1.msra.mxu0 0.0
  %95 = vmatprep.subr.mxu0 0.0
  %96 = vmatpush1.msra.mxu0 0.0
  %97 = vmatprep.subr.mxu0 0.0
  %98 = vmatpush1.msra.mxu0 0.0
  %99 = vmatprep.subr.mxu0 0.0
  %100 = vmatpush1.msra.mxu0 0.0
  %101 = vmatprep.subr.mxu0 0.0
  %102 = vmatpush1.msra.mxu0 0.0
  %103 = vmatprep.subr.mxu0 0.0
  %104 = vmatpush1.msra.mxu0 0.0
  %105 = vmatprep.subr.mxu0 0.0
  %106 = vmatpush1.msra.mxu0 0.0
  %107 = vmatprep.subr.mxu0 0.0
  %108 = vmatpush1.msra.mxu0 0.0
  %109 = vmatprep.subr.mxu0 0.0
  %110 = vmatpush1.msra.mxu0 0.0
  %111 = vmatprep.subr.mxu0 0.0
  %112 = vmatpush1.msra.mxu0 0.0
  %113 = vmatprep.subr.mxu0 0.0
  %114 = vmatpush1.msra.mxu0 0.0
  %115 = vmatprep.subr.mxu0 0.0
  %116 = vmatpush1.msra.mxu0 0.0
  %117 = vmatprep.subr.mxu0 0.0
  %118 = vmatpush1.msra.mxu0 0.0
  %119 = vmatprep.subr.mxu0 0.0
  %120 = vmatpush1.msra.mxu0 0.0
  %121 = vmatprep.subr.mxu0 0.0
  %122 = vmatpush1.msra.mxu0 0.0
  %123 = vmatprep.subr.mxu0 0.0
  %124 = vmatpush1.msra.mxu0 0.0
  %125 = vmatprep.mubr.f32.mxu0 0.0
  %126 = vmatmul.mubr.f32.gmra.mrb[0].mxu0 %v38
  %v127 = vpop.f32.mrb[0].mxu0
  %v128 = vadd.f32 0.0, %v127
  %v129 = vpop.f32.mrb[0].mxu0
  %130 = vmatprep.mubr.f32.mxu0 0.0
  %131 = vmatmul.mubr.f32.gmra.mrb[0].mxu0 %v41
  %v132 = vpop.f32.mrb[0].mxu0
  %v133 = vadd.f32 0.0, %v132
  %v134 = vpop.f32.mrb[0].mxu0
  %135 = vmatprep.mubr.f32.mxu0 0.0
  %136 = vmatmul.mubr.f32.gmra.mrb[0].mxu0 %v44
  %v137 = vpop.f32.mrb[0].mxu0
  %v138 = vadd.f32 0.0, %v137
  %v139 = vpop.f32.mrb[0].mxu0
  %140 = vmatprep.mubr.f32.mxu0 0.0
  %141 = vmatmul.mubr.f32.gmra.mrb[0].mxu0 %v47
  %v142 = vpop.f32.mrb[0].mxu0
  %v143 = vadd.f32 0.0, %v142
  %v144 = vpop.f32.mrb[0].mxu0
  %145 = vmatprep.mubr.f32.mxu0 0.0
  %146 = vmatmul.mubr.f32.gmra.mrb[0].mxu0 %v50
  %v147 = vpop.f32.mrb[0].mxu0
  %v148 = vadd.f32 0.0, %v147
  %v149 = vpop.f32.mrb[0].mxu0
  %150 = vmatprep.mubr.f32.mxu0 0.0
  %151 = vmatmul.mubr.f32.gmra.mrb[0].mxu0 %v53
  %v152 = vpop.f32.mrb[0].mxu0
  %v153 = vadd.f32 0.0, %v152
  %v154 = vpop.f32.mrb[0].mxu0
  %155 = vmatprep.mubr.f32.mxu0 0.0
  %156 = vmatmul.mubr.f32.gmra.mrb[0].mxu0 %v56
  %v157 = vpop.f32.mrb[0].mxu0
  %v158 = vadd.f32 0.0, %v157
  %v159 = vpop.f32.mrb[0].mxu0
  %160 = vmatprep.mubr.f32.mxu0 0.0
  %161 = vmatmul.mubr.f32.gmra.mrb[0].mxu0 %v59
  %v162 = vpop.f32.mrb[0].mxu0
  %v163 = vadd.f32 0.0, %v162
  %v164 = vpop.f32.mrb[0].mxu0
  %165 = vdwg.mxu0
  %vm166 = vcmask 261120
  %v167 = vsel %vm166, %v128, 0.0
  %v168 = vsel %vm166, %v133, 0.0
  %v169 = vadd.f32 %v167, %v168
  %v170 = vsel %vm166, %v138, 0.0
  %v171 = vadd.f32 %v169, %v170
  %v172 = vsel %vm166, %v143, 0.0
  %v173 = vadd.f32 %v171, %v172
  %v174 = vsel %vm166, %v148, 0.0
  %v175 = vadd.f32 %v173, %v174
  %v176 = vsel %vm166, %v153, 0.0
  %v177 = vadd.f32 %v175, %v176
  %v178 = vsel %vm166, %v158, 0.0
  %v179 = vadd.f32 %v177, %v178
  %v180 = vsel %vm166, %v163, 0.0
  %v181 = vadd.f32 %v179, %v180
  %v182 = vrot.slane %v181, 4
  %v183 = vadd.f32 %v181, %v182
  %v184 = vrot.slane %v183, 2
  %v185 = vadd.f32 %v183, %v184
  %v186 = vrot.slane %v185, 1
  %v187 = vadd.f32 %v185, %v186
  %v188 = vmul.f32 %v187, 0.015625
  %v189 = vmul.f32 %v128, %v128
  %v190 = vmul.f32 %v133, %v133
  %v191 = vmul.f32 %v138, %v138
  %v192 = vmul.f32 %v143, %v143
  %v193 = vmul.f32 %v148, %v148
  %v194 = vmul.f32 %v153, %v153
  %v195 = vmul.f32 %v158, %v158
  %v196 = vmul.f32 %v163, %v163
  %v197 = vsel %vm166, %v189, 0.0
  %v198 = vsel %vm166, %v190, 0.0
  %v199 = vadd.f32 %v197, %v198
  %v200 = vsel %vm166, %v191, 0.0
  %v201 = vadd.f32 %v199, %v200
  %v202 = vsel %vm166, %v192, 0.0
  %v203 = vadd.f32 %v201, %v202
  %v204 = vsel %vm166, %v193, 0.0
  %v205 = vadd.f32 %v203, %v204
  %v206 = vsel %vm166, %v194, 0.0
  %v207 = vadd.f32 %v205, %v206
  %v208 = vsel %vm166, %v195, 0.0
  %v209 = vadd.f32 %v207, %v208
  %v210 = vsel %vm166, %v196, 0.0
  %v211 = vadd.f32 %v209, %v210
  %v212 = vrot.slane %v211, 4
  %v213 = vadd.f32 %v211, %v212
  %v214 = vrot.slane %v213, 2
  %v215 = vadd.f32 %v213, %v214
  %v216 = vrot.slane %v215, 1
  %v217 = vadd.f32 %v215, %v216
  %v218 = vmul.f32 %v217, 0.015625
  %v219 = vmul.f32 %v188, %v188
  %v220 = vsub.f32 %v218, %v219
  %v221 = vmax.f32 %v220, 0.0
  %v222 = vld [vmem:[%s2] sm:$0x1]
  %v223 = vadd.f32 %v221, 1e-05
  %v224 = vrsqrt.pop %v223
  %v225 = vmul.f32 %v222, %v224
  %v226 = vld [vmem:[%s3] sm:$0x1]
  %v227 = vmul.f32 %v188, %v225
  %v228 = vsub.f32 %v226, %v227
  %v230 = vlaneseq
  %v231 = vshrl.u32 %v230, 7
  %v232 = vsub.s32 0, %v231
  %v233 = vrot.slane %v225, %v232
  %v235 = vmul.f32 %v128, %v233
  %v236 = vmul.f32 %v133, %v233
  %v237 = vmul.f32 %v138, %v233
  %v238 = vmul.f32 %v143, %v233
  %v239 = vmul.f32 %v148, %v233
  %v240 = vmul.f32 %v153, %v233
  %v241 = vmul.f32 %v158, %v233
  %v242 = vmul.f32 %v163, %v233
  %v244 = vlaneseq
  %v245 = vshrl.u32 %v244, 7
  %v246 = vsub.s32 0, %v245
  %v247 = vrot.slane %v228, %v246
  %v249 = vadd.f32 %v235, %v247
  %v250 = vadd.f32 %v236, %v247
  %v251 = vadd.f32 %v237, %v247
  %v252 = vadd.f32 %v238, %v247
  %v253 = vadd.f32 %v239, %v247
  %v254 = vadd.f32 %v240, %v247
  %v255 = vadd.f32 %v241, %v247
  %v256 = vadd.f32 %v242, %v247
  %v257 = vmax.f32 %v249, 0.0
  %v258 = vmax.f32 %v250, 0.0
  %v259 = vmax.f32 %v251, 0.0
  %v260 = vmax.f32 %v252, 0.0
  %v261 = vmax.f32 %v253, 0.0
  %v262 = vmax.f32 %v254, 0.0
  %v263 = vmax.f32 %v255, 0.0
  %v264 = vmax.f32 %v256, 0.0
  %v265 = vld [vmem:[%s4] sm:$0xff]
  %v266 = vld [vmem:[%s4 + $0x8] sm:$0xff]
  %v267 = vld [vmem:[%s4 + $0x10] sm:$0xff]
  %v268 = vld [vmem:[%s4 + $0x18] sm:$0xff]
  %v270 = vsel %vm166, %v257, 0
  %v273 = vsel %vm166, %v258, 0
  %v276 = vsel %vm166, %v259, 0
  %v279 = vsel %vm166, %v260, 0
  %v282 = vsel %vm166, %v261, 0
  %v285 = vsel %vm166, %v262, 0
  %v288 = vsel %vm166, %v263, 0
  %v291 = vsel %vm166, %v264, 0
  %293 = vmatprep.subr.mxu0 0.0
  %294 = vmatpush1.msra.mxu0 %v265
  %295 = vmatprep.subr.mxu0 0.0
  %296 = vmatpush1.msra.mxu0 %v266
  %297 = vmatprep.subr.mxu0 0.0
  %298 = vmatpush1.msra.mxu0 %v267
  %299 = vmatprep.subr.mxu0 0.0
  %300 = vmatpush1.msra.mxu0 %v268
  %301 = vmatprep.subr.mxu0 0.0
  %302 = vmatpush1.msra.mxu0 0.0
  %303 = vmatprep.subr.mxu0 0.0
  %304 = vmatpush1.msra.mxu0 0.0
  %305 = vmatprep.subr.mxu0 0.0
  %306 = vmatpush1.msra.mxu0 0.0
  %307 = vmatprep.subr.mxu0 0.0
  %308 = vmatpush1.msra.mxu0 0.0
  %309 = vmatprep.subr.mxu0 0.0
  %310 = vmatpush1.msra.mxu0 0.0
  %311 = vmatprep.subr.mxu0 0.0
  %312 = vmatpush1.msra.mxu0 0.0
  %313 = vmatprep.subr.mxu0 0.0
  %314 = vmatpush1.msra.mxu0 0.0
  %315 = vmatprep.subr.mxu0 0.0
  %316 = vmatpush1.msra.mxu0 0.0
  %317 = vmatprep.subr.mxu0 0.0
  %318 = vmatpush1.msra.mxu0 0.0
  %319 = vmatprep.subr.mxu0 0.0
  %320 = vmatpush1.msra.mxu0 0.0
  %321 = vmatprep.subr.mxu0 0.0
  %322 = vmatpush1.msra.mxu0 0.0
  %323 = vmatprep.subr.mxu0 0.0
  %324 = vmatpush1.msra.mxu0 0.0
  %325 = vmatprep.subr.mxu0 0.0
  %326 = vmatpush1.msra.mxu0 0.0
  %327 = vmatprep.subr.mxu0 0.0
  %328 = vmatpush1.msra.mxu0 0.0
  %329 = vmatprep.subr.mxu0 0.0
  %330 = vmatpush1.msra.mxu0 0.0
  %331 = vmatprep.subr.mxu0 0.0
  %332 = vmatpush1.msra.mxu0 0.0
  %333 = vmatprep.subr.mxu0 0.0
  %334 = vmatpush1.msra.mxu0 0.0
  %335 = vmatprep.subr.mxu0 0.0
  %336 = vmatpush1.msra.mxu0 0.0
  %337 = vmatprep.subr.mxu0 0.0
  %338 = vmatpush1.msra.mxu0 0.0
  %339 = vmatprep.subr.mxu0 0.0
  %340 = vmatpush1.msra.mxu0 0.0
  %341 = vmatprep.subr.mxu0 0.0
  %342 = vmatpush1.msra.mxu0 0.0
  %343 = vmatprep.subr.mxu0 0.0
  %344 = vmatpush1.msra.mxu0 0.0
  %345 = vmatprep.subr.mxu0 0.0
  %346 = vmatpush1.msra.mxu0 0.0
  %347 = vmatprep.subr.mxu0 0.0
  %348 = vmatpush1.msra.mxu0 0.0
  %349 = vmatprep.subr.mxu0 0.0
  %350 = vmatpush1.msra.mxu0 0.0
  %351 = vmatprep.subr.mxu0 0.0
  %352 = vmatpush1.msra.mxu0 0.0
  %353 = vmatprep.subr.mxu0 0.0
  %354 = vmatpush1.msra.mxu0 0.0
  %355 = vmatprep.subr.mxu0 0.0
  %356 = vmatpush1.msra.mxu0 0.0
  %357 = vmatprep.mubr.f32.mxu0 0.0
  %358 = vmatmul.mubr.f32.gmra.mrb[0].mxu0 %v270
  %v359 = vpop.f32.mrb[0].mxu0
  %v360 = vadd.f32 0.0, %v359
  %v361 = vpop.f32.mrb[0].mxu0
  %362 = vmatprep.mubr.f32.mxu0 0.0
  %363 = vmatmul.mubr.f32.gmra.mrb[0].mxu0 %v273
  %v364 = vpop.f32.mrb[0].mxu0
  %v365 = vadd.f32 0.0, %v364
  %v366 = vpop.f32.mrb[0].mxu0
  %367 = vmatprep.mubr.f32.mxu0 0.0
  %368 = vmatmul.mubr.f32.gmra.mrb[0].mxu0 %v276
  %v369 = vpop.f32.mrb[0].mxu0
  %v370 = vadd.f32 0.0, %v369
  %v371 = vpop.f32.mrb[0].mxu0
  %372 = vmatprep.mubr.f32.mxu0 0.0
  %373 = vmatmul.mubr.f32.gmra.mrb[0].mxu0 %v279
  %v374 = vpop.f32.mrb[0].mxu0
  %v375 = vadd.f32 0.0, %v374
  %v376 = vpop.f32.mrb[0].mxu0
  %377 = vmatprep.mubr.f32.mxu0 0.0
  %378 = vmatmul.mubr.f32.gmra.mrb[0].mxu0 %v282
  %v379 = vpop.f32.mrb[0].mxu0
  %v380 = vadd.f32 0.0, %v379
  %v381 = vpop.f32.mrb[0].mxu0
  %382 = vmatprep.mubr.f32.mxu0 0.0
  %383 = vmatmul.mubr.f32.gmra.mrb[0].mxu0 %v285
  %v384 = vpop.f32.mrb[0].mxu0
  %v385 = vadd.f32 0.0, %v384
  %v386 = vpop.f32.mrb[0].mxu0
  %387 = vmatprep.mubr.f32.mxu0 0.0
  %388 = vmatmul.mubr.f32.gmra.mrb[0].mxu0 %v288
  %v389 = vpop.f32.mrb[0].mxu0
  %v390 = vadd.f32 0.0, %v389
  %v391 = vpop.f32.mrb[0].mxu0
  %392 = vmatprep.mubr.f32.mxu0 0.0
  %393 = vmatmul.mubr.f32.gmra.mrb[0].mxu0 %v291
  %v394 = vpop.f32.mrb[0].mxu0
  %v395 = vadd.f32 0.0, %v394
  %v396 = vpop.f32.mrb[0].mxu0
  %397 = vdwg.mxu0
  %v398 = vsel %vm166, %v360, 0.0
  %v399 = vsel %vm166, %v365, 0.0
  %v400 = vadd.f32 %v398, %v399
  %v401 = vsel %vm166, %v370, 0.0
  %v402 = vadd.f32 %v400, %v401
  %v403 = vsel %vm166, %v375, 0.0
  %v404 = vadd.f32 %v402, %v403
  %v405 = vsel %vm166, %v380, 0.0
  %v406 = vadd.f32 %v404, %v405
  %v407 = vsel %vm166, %v385, 0.0
  %v408 = vadd.f32 %v406, %v407
  %v409 = vsel %vm166, %v390, 0.0
  %v410 = vadd.f32 %v408, %v409
  %v411 = vsel %vm166, %v395, 0.0
  %v412 = vadd.f32 %v410, %v411
  %v413 = vrot.slane %v412, 4
  %v414 = vadd.f32 %v412, %v413
  %v415 = vrot.slane %v414, 2
  %v416 = vadd.f32 %v414, %v415
  %v417 = vrot.slane %v416, 1
  %v418 = vadd.f32 %v416, %v417
  %v419 = vmul.f32 %v418, 0.015625
  %v420 = vmul.f32 %v360, %v360
  %v421 = vmul.f32 %v365, %v365
  %v422 = vmul.f32 %v370, %v370
  %v423 = vmul.f32 %v375, %v375
  %v424 = vmul.f32 %v380, %v380
  %v425 = vmul.f32 %v385, %v385
  %v426 = vmul.f32 %v390, %v390
  %v427 = vmul.f32 %v395, %v395
  %v428 = vsel %vm166, %v420, 0.0
  %v429 = vsel %vm166, %v421, 0.0
  %v430 = vadd.f32 %v428, %v429
  %v431 = vsel %vm166, %v422, 0.0
  %v432 = vadd.f32 %v430, %v431
  %v433 = vsel %vm166, %v423, 0.0
  %v434 = vadd.f32 %v432, %v433
  %v435 = vsel %vm166, %v424, 0.0
  %v436 = vadd.f32 %v434, %v435
  %v437 = vsel %vm166, %v425, 0.0
  %v438 = vadd.f32 %v436, %v437
  %v439 = vsel %vm166, %v426, 0.0
  %v440 = vadd.f32 %v438, %v439
  %v441 = vsel %vm166, %v427, 0.0
  %v442 = vadd.f32 %v440, %v441
  %v443 = vrot.slane %v442, 4
  %v444 = vadd.f32 %v442, %v443
  %v445 = vrot.slane %v444, 2
  %v446 = vadd.f32 %v444, %v445
  %v447 = vrot.slane %v446, 1
  %v448 = vadd.f32 %v446, %v447
  %v449 = vmul.f32 %v448, 0.015625
  %v450 = vmul.f32 %v419, %v419
  %v451 = vsub.f32 %v449, %v450
  %v452 = vmax.f32 %v451, 0.0
  %v453 = vld [vmem:[%s5] sm:$0x1]
  %v454 = vadd.f32 %v452, 1e-05
  %v455 = vrsqrt.pop %v454
  %v456 = vmul.f32 %v453, %v455
  %v457 = vld [vmem:[%s6] sm:$0x1]
  %v458 = vmul.f32 %v419, %v456
  %v459 = vsub.f32 %v457, %v458
  %v461 = vlaneseq
  %v462 = vshrl.u32 %v461, 7
  %v463 = vsub.s32 0, %v462
  %v464 = vrot.slane %v456, %v463
  %v466 = vmul.f32 %v360, %v464
  %v467 = vmul.f32 %v365, %v464
  %v468 = vmul.f32 %v370, %v464
  %v469 = vmul.f32 %v375, %v464
  %v470 = vmul.f32 %v380, %v464
  %v471 = vmul.f32 %v385, %v464
  %v472 = vmul.f32 %v390, %v464
  %v473 = vmul.f32 %v395, %v464
  %v475 = vlaneseq
  %v476 = vshrl.u32 %v475, 7
  %v477 = vsub.s32 0, %v476
  %v478 = vrot.slane %v459, %v477
  %v480 = vadd.f32 %v466, %v478
  %v481 = vadd.f32 %v467, %v478
  %v482 = vadd.f32 %v468, %v478
  %v483 = vadd.f32 %v469, %v478
  %v484 = vadd.f32 %v470, %v478
  %v485 = vadd.f32 %v471, %v478
  %v486 = vadd.f32 %v472, %v478
  %v487 = vadd.f32 %v473, %v478
  %488 = vst.msk [vmem:[%s7] sm:$0xff] %vm166, %v480
  %489 = vst.msk [vmem:[%s7 + $0x8] sm:$0xff] %vm166, %v481
  %490 = vst.msk [vmem:[%s7 + $0x10] sm:$0xff] %vm166, %v482
  %491 = vst.msk [vmem:[%s7 + $0x18] sm:$0xff] %vm166, %v483
  %492 = vst.msk [vmem:[%s7 + $0x20] sm:$0xff] %vm166, %v484
  %493 = vst.msk [vmem:[%s7 + $0x28] sm:$0xff] %vm166, %v485
  %494 = vst.msk [vmem:[%s7 + $0x30] sm:$0xff] %vm166, %v486
  %495 = vst.msk [vmem:[%s7 + $0x38] sm:$0xff] %vm166, %v487
  // Predicated region
  $region30: #{tpu_custom_call.1} parent=0 // pred_check
    _
  $region31: #{tpu_custom_call.1} parent=0 // pred_check_branch
    %497 = sbr.rel (0) target = $region33
  $region32: #{tpu_custom_call.1} parent=0 // pred_region
    _
  $region33: #{tpu_custom_call.1} parent=0 // pred_fallthru
    _
  // Predicated region
  $region34: #{tpu_custom_call.1} parent=0 // pred_check
    _
  $region35: #{tpu_custom_call.1} parent=0 // pred_check_branch
    %499 = sbr.rel (0) target = $region37
  $region36: #{tpu_custom_call.1} parent=0 // pred_region
    _
  $region37: #{tpu_custom_call.1} parent=0 // pred_fallthru
    _

</llo_original>
